<compile_context>
chip_gen: v7x
topology: tpu7x:2x2x1
jax: 0.10.0
libtpu: 0.0.40
codegen_flags: <defaults>
</compile_context>

<pallas_src>
import functools

import jax
import jax.numpy as jnp
from jax.experimental import pallas as pl
from jax.experimental.pallas import tpu as pltpu


def _align_cosine_kernel(e1_ref, e2_ref, out_ref, *, batch):
    """One (tb, D) batch tile -> one per-tile partial sum of cosines.

    out_ref is a (1, 8, 128) f32 block; the scalar partial is broadcast into it
    and the wrapper reads element [:, 0, 0].
    """
    tb = e1_ref.shape[0]

    e1 = e1_ref[...].astype(jnp.float32)
    e2 = e2_ref[...].astype(jnp.float32)

    # Three row reductions on the raw inputs (VPU mul + XLU lane reduce).
    dot = jnp.sum(e1 * e2, axis=-1, keepdims=True)
    ss1 = jnp.sum(e1 * e1, axis=-1, keepdims=True)
    ss2 = jnp.sum(e2 * e2, axis=-1, keepdims=True)

    # F.normalize eps=1e-12 clamps the norm -> clamp the squared norm at 1e-24.
    # rsqrt lowers to the EUP (separate VLIW slot) and is effectively free here.
    eps_sq = jnp.float32(1e-24)
    cos = (dot
           * jax.lax.rsqrt(jnp.maximum(ss1, eps_sq))
           * jax.lax.rsqrt(jnp.maximum(ss2, eps_sq)))

    # Ragged last batch tile: rows >= batch come from out-of-bounds block reads
    # (undefined data, possibly NaN/Inf).  Zero them before the sublane reduce;
    # one compare+select per vreg, hidden under the memory roofline.
    row_id = (pl.program_id(0) * tb
              + jax.lax.broadcasted_iota(jnp.int32, (tb, 1), 0))
    cos = jnp.where(row_id < batch, cos, jnp.float32(0.0))

    partial = jnp.sum(cos)
    out_ref[...] = jnp.broadcast_to(partial, out_ref.shape)


def _round_up(x: int, m: int) -> int:
    return (x + m - 1) // m * m


def _pick_vmem_limit_bytes() -> int:
    """Scoped-VMEM request per generation (v5e/v6e: 128 MiB phys, v7x: 64 MiB)."""
    vmem_cap = 128 * 1024 * 1024
    try:
        info = pltpu.get_tpu_info()
        vmem_cap = int(getattr(info, "vmem_capacity_bytes", vmem_cap))
    except Exception:
        pass
    if vmem_cap >= 100 * 1024 * 1024:     # v5e / v6e
        return 64 * 1024 * 1024
    return 48 * 1024 * 1024               # v7x (half the physical VMEM)


def align_cosine_loss(emb1: jax.Array, emb2: jax.Array, *,
                      block_rows: int | None = None) -> jax.Array:
    """Pallas implementation of AlignCosineLoss.forward. Returns a scalar."""
    assert emb1.shape == emb2.shape and emb1.ndim == 2
    B, D = emb1.shape

    vmem_limit = _pick_vmem_limit_bytes()
    itemsize = max(jnp.dtype(emb1.dtype).itemsize, jnp.dtype(emb2.dtype).itemsize)

    if block_rows is None:
        # Per-row VMEM cost: 2 inputs x 2 pipeline buffers in the HBM dtype,
        # ~5 f32 (tb, D) temporaries (upcasts + products), plus ~4 lane-padded
        # (tb, 1) f32 column intermediates (dot/ss1/ss2/cos -> 512 B/row each).
        budget = vmem_limit - 8 * 1024 * 1024          # headroom
        row_bytes = D * (2 * 2 * itemsize + 5 * 4) + 4 * 512
        block_rows = max(8, budget // row_bytes)

    tb = int(min(block_rows, _round_up(B, 8)))
    tb = max(8, (tb // 8) * 8)
    grid_b = pl.cdiv(B, tb)

    kernel = functools.partial(_align_cosine_kernel, batch=B)

    # Input blocks: last dim == full D (satisfies the (8,128) rule for any D);
    # second-minor tb is a multiple of 8.  Output blocks are exactly (8, 128)
    # aligned, one per grid step -> the batch axis can be "parallel".
    partials = pl.pallas_call(
        kernel,
        out_shape=jax.ShapeDtypeStruct((grid_b, 8, 128), jnp.float32),
        grid_spec=pltpu.PrefetchScalarGridSpec(
            num_scalar_prefetch=0,
            grid=(grid_b,),
            in_specs=[
                pl.BlockSpec((tb, D), lambda i: (i, 0)),
                pl.BlockSpec((tb, D), lambda i: (i, 0)),
            ],
            out_specs=pl.BlockSpec((1, 8, 128), lambda i: (i, 0, 0)),
        ),
        compiler_params=pltpu.CompilerParams(
            dimension_semantics=("parallel",),
            vmem_limit_bytes=vmem_limit,
        ),
    )(emb1, emb2)

    # Trivial final reduce in the wrapper (tree-ish, better accuracy than a
    # serial scalar accumulator); divide by the true B.
    return jnp.float32(1.0) - jnp.sum(partials[:, 0, 0]) * jnp.float32(1.0 / B)


def _reference(emb1, emb2):
    """Pure-JAX transcription of the PyTorch forward (exact eps semantics)."""
    e1 = jnp.asarray(emb1, jnp.float32)
    e2 = jnp.asarray(emb2, jnp.float32)
    e1n = e1 / jnp.maximum(jnp.linalg.norm(e1, axis=-1, keepdims=True), 1e-12)
    e2n = e2 / jnp.maximum(jnp.linalg.norm(e2, axis=-1, keepdims=True), 1e-12)
    dot = jnp.sum(e1n * e2n, axis=-1)
    denom = jnp.maximum(
        jnp.linalg.norm(e1n, axis=-1) * jnp.linalg.norm(e2n, axis=-1), 1e-8
    )
    return 1.0 - jnp.mean(dot / denom)


if __name__ == "__main__":
    key = jax.random.PRNGKey(0)
    k1, k2 = jax.random.split(key)
    B, D = 25, 32  # small session-level embedding batch; B not a multiple of 8
    emb1 = jax.random.normal(k1, (B, D), dtype=jnp.float32)
    emb2 = jax.random.normal(k2, (B, D), dtype=jnp.float32)

    ref = jax.block_until_ready(_reference(emb1, emb2))

    # Default path: single tile (25 rows -> tb=32, ragged rows masked in-kernel).
    loss = jax.block_until_ready(align_cosine_loss(emb1, emb2))
    assert jnp.allclose(loss, ref, atol=2e-5, rtol=2e-5), (loss, ref)

    # Multi-step parallel grid with a ragged last tile (tiles of 8 -> 4 steps,
    # last step has only 1 valid row): exercises the in-kernel tail mask.
    loss_grid = jax.block_until_ready(align_cosine_loss(emb1, emb2, block_rows=8))
    assert jnp.allclose(loss_grid, ref, atol=2e-5, rtol=2e-5), (loss_grid, ref)

    # bf16 inputs stream at half the HBM bytes; math is still f32 in-kernel.
    e1_bf = emb1.astype(jnp.bfloat16)
    e2_bf = emb2.astype(jnp.bfloat16)
    loss_bf = jax.block_until_ready(align_cosine_loss(e1_bf, e2_bf))
    ref_bf = jax.block_until_ready(_reference(e1_bf, e2_bf))
    assert jnp.allclose(loss_bf, ref_bf, atol=1e-3, rtol=1e-3), (loss_bf, ref_bf)

    print("KERNEL_OK")
</pallas_src>

<mosaic_0001>
module attributes {stable_mosaic.version = 11 : i64} {
  func.func @_align_cosine_kernel(%arg0: i32, %arg1: memref<32x32xf32, #tpu.memory_space<vmem>>, %arg2: memref<32x32xf32, #tpu.memory_space<vmem>>, %arg3: memref<1x8x128xf32, #tpu.memory_space<vmem>>) attributes {dimension_semantics = [#tpu.dimension_semantics<parallel>], iteration_bounds = array<i64: 1>, scalar_prefetch = 0 : i64, scratch_operands = 0 : i64, tpu.core_type = #tpu.core_type<tc>, window_params = [{transform_indices = @transform_0, window_bounds = array<i64: 32, 32>}, {transform_indices = @transform_1, window_bounds = array<i64: 32, 32>}, {transform_indices = @transform_2, window_bounds = array<i64: 1, 8, 128>}]} {
    %c0 = arith.constant 0 : index
    %c0_0 = arith.constant 0 : index
    %0 = vector.load %arg1[%c0, %c0_0] : memref<32x32xf32, #tpu.memory_space<vmem>>, vector<32x32xf32>
    %c0_1 = arith.constant 0 : index
    %c0_2 = arith.constant 0 : index
    %1 = vector.load %arg2[%c0_1, %c0_2] : memref<32x32xf32, #tpu.memory_space<vmem>>, vector<32x32xf32>
    %2 = arith.mulf %0, %1 : vector<32x32xf32>
    %cst = arith.constant dense<0.000000e+00> : vector<32xf32>
    %3 = vector.multi_reduction <add>, %2, %cst [1] : vector<32x32xf32> to vector<32xf32>
    %4 = vector.shape_cast %3 : vector<32xf32> to vector<32x1xf32>
    %5 = arith.mulf %0, %0 : vector<32x32xf32>
    %cst_3 = arith.constant dense<0.000000e+00> : vector<32xf32>
    %6 = vector.multi_reduction <add>, %5, %cst_3 [1] : vector<32x32xf32> to vector<32xf32>
    %7 = vector.shape_cast %6 : vector<32xf32> to vector<32x1xf32>
    %8 = arith.mulf %1, %1 : vector<32x32xf32>
    %cst_4 = arith.constant dense<0.000000e+00> : vector<32xf32>
    %9 = vector.multi_reduction <add>, %8, %cst_4 [1] : vector<32x32xf32> to vector<32xf32>
    %10 = vector.shape_cast %9 : vector<32xf32> to vector<32x1xf32>
    %cst_5 = arith.constant 1.000000e-24 : f32
    %11 = vector.broadcast %cst_5 : f32 to vector<32x1xf32>
    %12 = arith.maximumf %7, %11 : vector<32x1xf32>
    %13 = math.rsqrt %12 : vector<32x1xf32>
    %14 = arith.mulf %4, %13 : vector<32x1xf32>
    %cst_6 = arith.constant 1.000000e-24 : f32
    %15 = vector.broadcast %cst_6 : f32 to vector<32x1xf32>
    %16 = arith.maximumf %10, %15 : vector<32x1xf32>
    %17 = math.rsqrt %16 : vector<32x1xf32>
    %18 = arith.mulf %14, %17 : vector<32x1xf32>
    %c32_i32 = arith.constant 32 : i32
    %19 = arith.muli %arg0, %c32_i32 : i32
    %20 = tpu.iota {dimensions = array<i32: 0>} : vector<32x1xi32>
    %21 = vector.broadcast %19 : i32 to vector<32x1xi32>
    %22 = arith.addi %21, %20 : vector<32x1xi32>
    %c25_i32 = arith.constant 25 : i32
    %23 = vector.broadcast %c25_i32 : i32 to vector<32x1xi32>
    %24 = arith.cmpi slt, %22, %23 : vector<32x1xi32>
    %cst_7 = arith.constant 0.000000e+00 : f32
    %25 = vector.broadcast %cst_7 : f32 to vector<32x1xf32>
    %26 = arith.select %24, %18, %25 : vector<32x1xi1>, vector<32x1xf32>
    %27 = vector.shape_cast %26 : vector<32x1xf32> to vector<1x32x1xf32>
    %cst_8 = arith.constant dense<0.000000e+00> : vector<1xf32>
    %28 = vector.multi_reduction <add>, %27, %cst_8 [1, 2] : vector<1x32x1xf32> to vector<1xf32>
    %29 = vector.shape_cast %28 : vector<1xf32> to vector<1x1x1xf32>
    %30 = vector.extract %29[0, 0, 0] : f32 from vector<1x1x1xf32>
    %31 = vector.broadcast %30 : f32 to vector<1x8x128xf32>
    %c0_9 = arith.constant 0 : index
    %c0_10 = arith.constant 0 : index
    %c0_11 = arith.constant 0 : index
    %32 = vector.load %arg3[%c0_9, %c0_10, %c0_11] : memref<1x8x128xf32, #tpu.memory_space<vmem>>, vector<1x8x128xf32>
    tpu.vector_store %arg3[%c0_9, %c0_10, %c0_11], %31 {strides = array<i32>} : memref<1x8x128xf32, #tpu.memory_space<vmem>>, vector<1x8x128xf32>,
    return
  }
  func.func @transform_0(%arg0: i32) -> (i32, i32) {
    %c0_i32 = arith.constant 0 : i32
    %c0_i32_0 = arith.constant 0 : i32
    return %arg0, %c0_i32 : i32, i32
  }
  func.func @transform_1(%arg0: i32) -> (i32, i32) {
    %c0_i32 = arith.constant 0 : i32
    %c0_i32_0 = arith.constant 0 : i32
    return %arg0, %c0_i32 : i32, i32
  }
  func.func @transform_2(%arg0: i32) -> (i32, i32, i32) {
    %c0_i32 = arith.constant 0 : i32
    %c0_i32_0 = arith.constant 0 : i32
    %c0_i32_1 = arith.constant 0 : i32
    return %arg0, %c0_i32, %c0_i32_0 : i32, i32, i32
  }
}

</mosaic_0001>

<llo_original>
// kernel: tpu_custom_call.1
$region0: #{tpu_custom_call.1}
  #allocation0 [shape = 'u32[]', space=smem, size = 0x4, offset = 0x4, fixed_abs, tag = 'smem constant byte address 0x4 - core index']
  #allocation1 [shape = 'u32[144,128]{1,0:T(1,128)}', space=vmem, size = 0x12000, scoped, tag = 'internal scratch']
  %s0 = inlined_call_operand.hbm [shape: f32[25,32], index: 0, kind: input, shape index: {}]
  %s1 = inlined_call_operand.hbm [shape: f32[25,32], index: 1, kind: input, shape index: {}]
  %s2 = inlined_call_operand.hbm [shape: f32[1,8,128], index: 2, kind: output, shape index: {}]
  %s3 = sld [smem:[#allocation0]]
  $region26: #{tpu_custom_call.1} parent=0
    _
  %s5 = ssub.s32 1, %s3
  %s6 = scalar_select 0, %s5, %s3
  $region1: #{tpu_custom_call.1} parent=0
    #allocation2 [shape = 'u8[16384]{0}', space=vmem, size = 0x4000, scoped, tag = 'input window, operand 0, single buffered']
    #allocation3 [shape = 's32[1]{0}', space=sflag, size = 0x4, scoped, tag = 'scoped memory for tpu_custom_call.1']
    #allocation4 [shape = 's32[1]{0}', space=sflag, size = 0x4, scoped, tag = 'scoped memory for tpu_custom_call.1']
    #allocation5 [shape = 'u8[16384]{0}', space=vmem, size = 0x4000, scoped, tag = 'input window, operand 1, single buffered']
    #allocation6 [shape = 's32[1]{0}', space=sflag, size = 0x4, scoped, tag = 'scoped memory for tpu_custom_call.1']
    #allocation7 [shape = 'u8[4096]{0}', space=vmem, size = 0x1000, scoped, tag = 'output window, operand 0, single buffered']
    %7 = vsyncpa [#allocation3], 0
    %8 = vsyncpa [#allocation6], 0
    %9 = vsyncpa [#allocation4], 0
    // Predicated region
    $region2: #{tpu_custom_call.1} parent=1 // pred_check
      _
    $region3: #{tpu_custom_call.1} parent=1 // pred_check_branch
      %11 = sbr.rel (0) target = $region5
    $region4: #{tpu_custom_call.1} parent=1 // pred_region
      %s13 = ssub.s32 512, 512
      %14 = vsyncadd [#allocation3], %s13
      %s15 = sshll.u32 [#allocation2], 4
      %s16 = int_to_ptr.vmem [resolvable:$true] %s15
      %21 = dma.hbm_to_vmem [thread:$0]  %s0, 512, %s16, [#allocation3], 128, 128, 8
    $region5: #{tpu_custom_call.1} parent=1 // pred_fallthru
      _
    // Predicated region
    $region6: #{tpu_custom_call.1} parent=1 // pred_check
      _
    $region7: #{tpu_custom_call.1} parent=1 // pred_check_branch
      %23 = sbr.rel (0) target = $region9
    $region8: #{tpu_custom_call.1} parent=1 // pred_region
      %s25 = ssub.s32 512, 512
      %26 = vsyncadd [#allocation6], %s25
      %s27 = sshll.u32 [#allocation5], 4
      %s28 = int_to_ptr.vmem [resolvable:$true] %s27
      %33 = dma.hbm_to_vmem [thread:$0]  %s1, 512, %s28, [#allocation6], 128, 128, 8
    $region9: #{tpu_custom_call.1} parent=1 // pred_fallthru
      _
    // Predicated region
    $region10: #{tpu_custom_call.1} parent=1 // pred_check
      _
    $region11: #{tpu_custom_call.1} parent=1 // pred_check_branch
      %35 = sbr.rel (0) target = $region13
    $region12: #{tpu_custom_call.1} parent=1 // pred_region
      %36 = dma.done [#allocation3], 512
    $region13: #{tpu_custom_call.1} parent=1 // pred_fallthru
      _
    // Predicated region
    $region14: #{tpu_custom_call.1} parent=1 // pred_check
      _
    $region15: #{tpu_custom_call.1} parent=1 // pred_check_branch
      %38 = sbr.rel (0) target = $region17
    $region16: #{tpu_custom_call.1} parent=1 // pred_region
      %39 = dma.done [#allocation6], 512
    $region17: #{tpu_custom_call.1} parent=1 // pred_fallthru
      _
    %v40 = vld [vmem:[#allocation2] sm:$0xff]
    %v41 = vld [vmem:[#allocation2 + $0x8] sm:$0xff]
    %v42 = vld [vmem:[#allocation2 + $0x10] sm:$0xff]
    %v43 = vld [vmem:[#allocation2 + $0x18] sm:$0xff]
    %v44 = vld [vmem:[#allocation5] sm:$0xff]
    %v45 = vld [vmem:[#allocation5 + $0x8] sm:$0xff]
    %v46 = vld [vmem:[#allocation5 + $0x10] sm:$0xff]
    %v47 = vld [vmem:[#allocation5 + $0x18] sm:$0xff]
    %v48 = vmul.f32 %v40, %v44
    %v49 = vmul.f32 %v41, %v45
    %v50 = vmul.f32 %v42, %v46
    %v51 = vmul.f32 %v43, %v47
    %vm52 = vcmask 261120
    %v53 = vsel %vm52, %v48, 0.0
    %54 = vadd.xlane.f32.xlu0 %v53
    %v55 = vpop.xlane.xlu0 %54
    %v56 = vsel %vm52, %v49, 0.0
    %57 = vadd.xlane.f32.xlu0 %v56
    %v58 = vpop.xlane.xlu0 %57
    %v59 = vsel %vm52, %v50, 0.0
    %60 = vadd.xlane.f32.xlu0 %v59
    %v61 = vpop.xlane.xlu0 %60
    %v62 = vsel %vm52, %v51, 0.0
    %63 = vadd.xlane.f32.xlu0 %v62
    %v64 = vpop.xlane.xlu0 %63
    %v65 = vmul.f32 %v40, %v40
    %v66 = vmul.f32 %v41, %v41
    %v67 = vmul.f32 %v42, %v42
    %v68 = vmul.f32 %v43, %v43
    %v69 = vsel %vm52, %v65, 0.0
    %70 = vadd.xlane.f32.xlu0 %v69
    %v71 = vpop.xlane.xlu0 %70
    %v72 = vsel %vm52, %v66, 0.0
    %73 = vadd.xlane.f32.xlu0 %v72
    %v74 = vpop.xlane.xlu0 %73
    %v75 = vsel %vm52, %v67, 0.0
    %76 = vadd.xlane.f32.xlu0 %v75
    %v77 = vpop.xlane.xlu0 %76
    %v78 = vsel %vm52, %v68, 0.0
    %79 = vadd.xlane.f32.xlu0 %v78
    %v80 = vpop.xlane.xlu0 %79
    %v81 = vmul.f32 %v44, %v44
    %v82 = vmul.f32 %v45, %v45
    %v83 = vmul.f32 %v46, %v46
    %v84 = vmul.f32 %v47, %v47
    %v85 = vsel %vm52, %v81, 0.0
    %86 = vadd.xlane.f32.xlu0 %v85
    %v87 = vpop.xlane.xlu0 %86
    %v88 = vsel %vm52, %v82, 0.0
    %89 = vadd.xlane.f32.xlu0 %v88
    %v90 = vpop.xlane.xlu0 %89
    %v91 = vsel %vm52, %v83, 0.0
    %92 = vadd.xlane.f32.xlu0 %v91
    %v93 = vpop.xlane.xlu0 %92
    %v94 = vsel %vm52, %v84, 0.0
    %95 = vadd.xlane.f32.xlu0 %v94
    %v96 = vpop.xlane.xlu0 %95
    %v97 = vmax.f32 %v71, 1e-24
    %v98 = vmax.f32 %v74, 1e-24
    %v99 = vmax.f32 %v77, 1e-24
    %v100 = vmax.f32 %v80, 1e-24
    %v101 = vrsqrt.pop %v97
    %v102 = vrsqrt.pop %v98
    %v103 = vrsqrt.pop %v99
    %v104 = vrsqrt.pop %v100
    %v105 = vmul.f32 %v55, %v101
    %v106 = vmul.f32 %v58, %v102
    %v107 = vmul.f32 %v61, %v103
    %v108 = vmul.f32 %v64, %v104
    %v109 = vmax.f32 %v87, 1e-24
    %v110 = vmax.f32 %v90, 1e-24
    %v111 = vmax.f32 %v93, 1e-24
    %v112 = vmax.f32 %v96, 1e-24
    %v113 = vrsqrt.pop %v109
    %v114 = vrsqrt.pop %v110
    %v115 = vrsqrt.pop %v111
    %v116 = vrsqrt.pop %v112
    %v117 = vmul.f32 %v105, %v113
    %v118 = vmul.f32 %v106, %v114
    %v119 = vmul.f32 %v107, %v115
    %v120 = vmul.f32 %v108, %v116
    %s121 = smul.u32 0, 32
    %v122 = vlaneseq
    %v123 = vshrl.u32 %v122, 7
    %v124 = vadd.s32 %v123, 8
    %v125 = vadd.s32 %v123, 16
    %v126 = vadd.s32 %v123, 24
    %v127 = vstv %s121
    %v128 = vadd.s32 %v127, %v123
    %v129 = vadd.s32 %v127, %v124
    %v130 = vadd.s32 %v127, %v125
    %v131 = vadd.s32 %v127, %v126
    %vm132 = vcmp.lt.s32.totalorder %v128, 25
    %vm133 = vcmp.lt.s32.totalorder %v129, 25
    %vm134 = vcmp.lt.s32.totalorder %v130, 25
    %vm135 = vcmp.lt.s32.totalorder %v131, 25
    %v136 = vsel %vm132, %v117, 0.0
    %v137 = vsel %vm133, %v118, 0.0
    %v138 = vsel %vm134, %v119, 0.0
    %v139 = vsel %vm135, %v120, 0.0
    %vm140 = vcmask 7168
    %v141 = vsel %vm140, %v136, 0.0
    %v142 = vsel %vm140, %v137, 0.0
    %v143 = vadd.f32 %v141, %v142
    %v144 = vsel %vm140, %v138, 0.0
    %v145 = vadd.f32 %v143, %v144
    %v146 = vsel %vm140, %v139, 0.0
    %v147 = vadd.f32 %v145, %v146
    %148 = vadd.xlane.f32.xlu0 %v147
    %v149 = vpop.xlane.xlu0 %148
    %v150 = vrot.slane %v149, 4
    %v151 = vadd.f32 %v149, %v150
    %v152 = vrot.slane %v151, 2
    %v153 = vadd.f32 %v151, %v152
    %v154 = vrot.slane %v153, 1
    %v155 = vadd.f32 %v153, %v154
    %s156 = vtos %v155
    %v157 = vstv %s156
    %158 = vst [vmem:[#allocation7] sm:$0xff] %v157
    // Predicated region
    $region18: #{tpu_custom_call.1} parent=1 // pred_check
      _
    $region19: #{tpu_custom_call.1} parent=1 // pred_check_branch
      %160 = sbr.rel (0) target = $region21
    $region20: #{tpu_custom_call.1} parent=1 // pred_region
      %s162 = ssub.s32 128, 128
      %163 = vsyncadd [#allocation4], %s162
      %s165 = sshll.u32 [#allocation7], 4
      %s166 = int_to_ptr.vmem [resolvable:$true] %s165
      %168 = dma.vmem_to_hbm [thread:$0]  %s166, 128, %s2, [#allocation4]
    $region21: #{tpu_custom_call.1} parent=1 // pred_fallthru
      _
    // Predicated region
    $region22: #{tpu_custom_call.1} parent=1 // pred_check
      _
    $region23: #{tpu_custom_call.1} parent=1 // pred_check_branch
      %170 = sbr.rel (0) target = $region25
    $region24: #{tpu_custom_call.1} parent=1 // pred_region
      %171 = dma.done [#allocation4], 128
    $region25: #{tpu_custom_call.1} parent=1 // pred_fallthru
      _
    %172 = vsyncpa [#allocation3], 1
    %173 = vsyncpa [#allocation6], 1
    %174 = vsyncpa [#allocation4], 1

</llo_original>
